<compile_context>
chip_gen: v5e
topology: v5e:2x2
jax: 0.10.0
libtpu: 0.0.40
codegen_flags: <defaults>
</compile_context>

<pallas_src>
import functools

import jax
import jax.numpy as jnp
from jax import lax
from jax.experimental import pallas as pl
from jax.experimental.pallas import tpu as pltpu

BN_EPS = 1e-5


def _round_up(x, m):
    return (x + m - 1) // m * m


def conv_stats_kernel(x_ref, w_ref, stats_ref):
    """Pass 1: accumulate per-channel sum and sum-of-squares of the conv output."""
    @pl.when(pl.program_id(0) == 0)
    def _():
        stats_ref[...] = jnp.zeros_like(stats_ref)

    y = jnp.dot(x_ref[...], w_ref[...], preferred_element_type=jnp.float32)  # (TM, OCP) f32
    stats_ref[0:1, :] += jnp.sum(y, axis=0, keepdims=True)
    stats_ref[1:2, :] += jnp.sum(y * y, axis=0, keepdims=True)


def conv_bn_relu_kernel(x_ref, w_ref, stats_ref, gamma_ref, beta_ref, o_ref, *, inv_m):
    """Pass 2: conv matmul -> normalize with finished batch stats -> affine -> ReLU."""
    y = jnp.dot(x_ref[...], w_ref[...], preferred_element_type=jnp.float32)  # (TM, OCP) f32
    mean = stats_ref[0:1, :] * inv_m
    var = jnp.maximum(stats_ref[1:2, :] * inv_m - mean * mean, 0.0)
    scale = gamma_ref[...] * lax.rsqrt(var + BN_EPS)
    shift = beta_ref[...] - mean * scale
    o_ref[...] = jnp.maximum(y * scale + shift, 0.0)


def basic_conv(x, weight, bias, gamma, beta, *, k, p, s):
    """x: (N, C, H, W) f32, weight: (OC, C, k, k). Returns (N, OC, OH, OW) f32.

    `bias` is accepted for API parity but is mathematically cancelled by the
    training-mode BatchNorm that follows the conv, so it is not used.
    """
    del bias
    N, C, H, W = x.shape
    OC = weight.shape[0]
    OH = (H + 2 * p - k) // s + 1
    OW = (W + 2 * p - k) // s + 1
    M = N * OH * OW
    K = C * k * k
    OCP = _round_up(OC, 128)                       # lane-dense output channels

    # Tile size: biggest M tile that stays comfortably inside scoped VMEM everywhere.
    tm_max = 1024
    try:
        if pltpu.get_tpu_info().vmem_capacity_bytes >= (96 << 20):   # v5e / v6e
            tm_max = 2048
    except Exception:
        pass
    TM = min(tm_max, _round_up(M, 128))
    MP = _round_up(M, TM)
    num_tiles = MP // TM

    # --- glue: im2col (patch rows), zero-pad rows to MP ---
    xp = jnp.pad(x, ((0, 0), (0, 0), (p, p), (p, p)))
    cols = []
    for di in range(k):
        for dj in range(k):
            cols.append(xp[:, :, di:di + s * OH:s, dj:dj + s * OW:s])   # (N, C, OH, OW)
    patches = jnp.stack(cols, axis=2)                                   # (N, C, k*k, OH, OW)
    x_mat = patches.transpose(0, 3, 4, 1, 2).reshape(M, K)
    x_mat = jnp.pad(x_mat, ((0, MP - M), (0, 0))).astype(jnp.bfloat16)  # zero rows are a no-op

    w_mat = weight.reshape(OC, K).T.astype(jnp.float32)                 # (K, OC)
    w_mat = jnp.pad(w_mat, ((0, 0), (0, OCP - OC))).astype(jnp.bfloat16)
    g2 = jnp.pad(gamma.astype(jnp.float32), (0, OCP - OC), constant_values=1.0).reshape(1, OCP)
    b2 = jnp.pad(beta.astype(jnp.float32), (0, OCP - OC)).reshape(1, OCP)

    x_spec = pl.BlockSpec((TM, K), lambda i: (i, 0))
    w_spec = pl.BlockSpec((K, OCP), lambda i: (0, 0))
    full2 = lambda shape: pl.BlockSpec(shape, lambda i: (0, 0))

    # ---- pass 1: per-channel sum / sumsq of the conv output (accumulator output) ----
    stats = pl.pallas_call(
        conv_stats_kernel,
        out_shape=jax.ShapeDtypeStruct((2, OCP), jnp.float32),
        grid=(num_tiles,),
        in_specs=[x_spec, w_spec],
        out_specs=full2((2, OCP)),
        compiler_params=pltpu.CompilerParams(dimension_semantics=("arbitrary",)),
    )(x_mat, w_mat)

    # ---- pass 2: normalize + affine + ReLU (independent tiles -> parallel) ----
    out_p = pl.pallas_call(
        functools.partial(conv_bn_relu_kernel, inv_m=1.0 / float(M)),
        out_shape=jax.ShapeDtypeStruct((MP, OCP), jnp.float32),
        grid=(num_tiles,),
        in_specs=[x_spec, w_spec, full2((2, OCP)), full2((1, OCP)), full2((1, OCP))],
        out_specs=pl.BlockSpec((TM, OCP), lambda i: (i, 0)),
        compiler_params=pltpu.CompilerParams(dimension_semantics=("parallel",)),
    )(x_mat, w_mat, stats, g2, b2)

    # --- glue: strip padding, back to NCHW ---
    return out_p[:M, :OC].reshape(N, OH, OW, OC).transpose(0, 3, 1, 2)


if __name__ == "__main__":
    # BasicConv(in_channel=4, out_channel=8, k=3, p=1, s=1) on x: (2, 4, 16, 16)
    in_channel, out_channel, k, p, s = 4, 8, 3, 1, 1
    N, H, W = 2, 16, 16

    key = jax.random.PRNGKey(0)
    kx, kw, kb, kg, kbe = jax.random.split(key, 5)

    x = jax.random.normal(kx, (N, in_channel, H, W), dtype=jnp.float32)
    weight = jax.random.normal(kw, (out_channel, in_channel, k, k), dtype=jnp.float32) * 0.1
    bias = jax.random.normal(kb, (out_channel,), dtype=jnp.float32) * 0.1
    gamma = 1.0 + 0.1 * jax.random.normal(kg, (out_channel,), dtype=jnp.float32)
    beta = 0.1 * jax.random.normal(kbe, (out_channel,), dtype=jnp.float32)

    y = basic_conv(x, weight, bias, gamma, beta, k=k, p=p, s=s)
    y = jax.block_until_ready(y)
    assert y.shape == (N, out_channel, H, W), y.shape

    # Plain-JAX f32 reference (conv + bias + training-mode BN + ReLU); loose tol for bf16 matmul.
    conv = lax.conv_general_dilated(
        x, weight, window_strides=(s, s), padding=[(p, p), (p, p)],
        dimension_numbers=("NCHW", "OIHW", "NCHW")) + bias.reshape(1, -1, 1, 1)
    mean = conv.mean(axis=(0, 2, 3), keepdims=True)
    var = conv.var(axis=(0, 2, 3), keepdims=True)
    ref = jnp.maximum((conv - mean) * lax.rsqrt(var + BN_EPS)
                      * gamma.reshape(1, -1, 1, 1) + beta.reshape(1, -1, 1, 1), 0.0)
    err = float(jnp.max(jnp.abs(y - ref)))
    assert err < 0.1, f"max abs error vs f32 reference: {err}"
    print("KERNEL_OK")
</pallas_src>

<mosaic_0001>
module attributes {stable_mosaic.version = 11 : i64} {
  func.func @conv_stats_kernel(%arg0: i32, %arg1: memref<512x36xbf16, #tpu.memory_space<vmem>>, %arg2: memref<36x128xbf16, #tpu.memory_space<vmem>>, %arg3: memref<2x128xf32, #tpu.memory_space<vmem>>) attributes {dimension_semantics = [#tpu.dimension_semantics<arbitrary>], iteration_bounds = array<i64: 1>, scalar_prefetch = 0 : i64, scratch_operands = 0 : i64, tpu.core_type = #tpu.core_type<tc>, window_params = [{transform_indices = @transform_0, window_bounds = array<i64: 512, 36>}, {pipeline_mode = #tpu.pipeline_mode<synchronous>, transform_indices = @transform_1, window_bounds = array<i64: 36, 128>}, {pipeline_mode = #tpu.pipeline_mode<synchronous>, transform_indices = @transform_2, window_bounds = array<i64: 2, 128>}]} {
    %c0_i32 = arith.constant 0 : i32
    %0 = arith.cmpi eq, %arg0, %c0_i32 : i32
    %1 = arith.extui %0 : i1 to i32
    %c0_i32_0 = arith.constant 0 : i32
    %2 = arith.cmpi ne, %1, %c0_i32_0 : i32
    scf.if %2 {
      %cst_13 = arith.constant 0.000000e+00 : f32
      %17 = vector.broadcast %cst_13 : f32 to vector<2x128xf32>
      %c0_14 = arith.constant 0 : index
      %c0_15 = arith.constant 0 : index
      %18 = vector.load %arg3[%c0_14, %c0_15] : memref<2x128xf32, #tpu.memory_space<vmem>>, vector<2x128xf32>
      tpu.vector_store %arg3[%c0_14, %c0_15], %17 {strides = array<i32>} : memref<2x128xf32, #tpu.memory_space<vmem>>, vector<2x128xf32>,
    } else {
    }
    %c0 = arith.constant 0 : index
    %c0_1 = arith.constant 0 : index
    %3 = vector.load %arg1[%c0, %c0_1] : memref<512x36xbf16, #tpu.memory_space<vmem>>, vector<512x36xbf16>
    %c0_2 = arith.constant 0 : index
    %c0_3 = arith.constant 0 : index
    %4 = vector.load %arg2[%c0_2, %c0_3] : memref<36x128xbf16, #tpu.memory_space<vmem>>, vector<36x128xbf16>
    %cst = arith.constant dense<0.000000e+00> : vector<512x128xf32>
    %5 = tpu.matmul %3, %4, %cst {dimension_numbers = #tpu.dot_dimension_numbers<[1], [0], [0], [1], [0, 0, 1, 1], [], []>} : vector<512x36xbf16>, vector<36x128xbf16>, vector<512x128xf32> -> vector<512x128xf32>
    %c0_4 = arith.constant 0 : index
    %c0_5 = arith.constant 0 : index
    %6 = vector.load %arg3[%c0_4, %c0_5] : memref<2x128xf32, #tpu.memory_space<vmem>>, vector<1x128xf32>
    %cst_6 = arith.constant dense<0.000000e+00> : vector<128xf32>
    %7 = vector.multi_reduction <add>, %5, %cst_6 [0] : vector<512x128xf32> to vector<128xf32>
    %8 = vector.shape_cast %7 : vector<128xf32> to vector<1x128xf32>
    %9 = arith.addf %6, %8 : vector<1x128xf32>
    %c0_7 = arith.constant 0 : index
    %c0_8 = arith.constant 0 : index
    %10 = vector.load %arg3[%c0_7, %c0_8] : memref<2x128xf32, #tpu.memory_space<vmem>>, vector<1x128xf32>
    tpu.vector_store %arg3[%c0_7, %c0_8], %9 {strides = array<i32>} : memref<2x128xf32, #tpu.memory_space<vmem>>, vector<1x128xf32>,
    %c1 = arith.constant 1 : index
    %c0_9 = arith.constant 0 : index
    %11 = vector.load %arg3[%c1, %c0_9] : memref<2x128xf32, #tpu.memory_space<vmem>>, vector<1x128xf32>
    %12 = arith.mulf %5, %5 : vector<512x128xf32>
    %cst_10 = arith.constant dense<0.000000e+00> : vector<128xf32>
    %13 = vector.multi_reduction <add>, %12, %cst_10 [0] : vector<512x128xf32> to vector<128xf32>
    %14 = vector.shape_cast %13 : vector<128xf32> to vector<1x128xf32>
    %15 = arith.addf %11, %14 : vector<1x128xf32>
    %c1_11 = arith.constant 1 : index
    %c0_12 = arith.constant 0 : index
    %16 = vector.load %arg3[%c1_11, %c0_12] : memref<2x128xf32, #tpu.memory_space<vmem>>, vector<1x128xf32>
    tpu.vector_store %arg3[%c1_11, %c0_12], %15 {strides = array<i32>} : memref<2x128xf32, #tpu.memory_space<vmem>>, vector<1x128xf32>,
    return
  }
  func.func @transform_0(%arg0: i32) -> (i32, i32) {
    %c0_i32 = arith.constant 0 : i32
    %c0_i32_0 = arith.constant 0 : i32
    return %arg0, %c0_i32 : i32, i32
  }
  func.func @transform_1(%arg0: i32) -> (i32, i32) {
    %c0_i32 = arith.constant 0 : i32
    %c0_i32_0 = arith.constant 0 : i32
    %c0_i32_1 = arith.constant 0 : i32
    return %c0_i32, %c0_i32_0 : i32, i32
  }
  func.func @transform_2(%arg0: i32) -> (i32, i32) {
    %c0_i32 = arith.constant 0 : i32
    %c0_i32_0 = arith.constant 0 : i32
    %c0_i32_1 = arith.constant 0 : i32
    return %c0_i32, %c0_i32_0 : i32, i32
  }
}

</mosaic_0001>

<llo_original>
// kernel: tpu_custom_call.1
$region0: #{tpu_custom_call.1}
  #allocation0 [shape = 'u32[]', space=smem, size = 0x4, offset = 0x4, fixed_abs, tag = 'smem constant byte address 0x4 - core index']
  #allocation1 [shape = 'u32[72,128]{1,0:T(1,128)}', space=vmem, size = 0x9000, scoped, tag = 'internal scratch']
  %s0 = inlined_call_operand.vmem [shape: bf16[512,36], index: 0, kind: input, shape index: {}]
  %s1 = inlined_call_operand.vmem [shape: bf16[36,128], index: 1, kind: input, shape index: {}]
  %s2 = inlined_call_operand.hbm [shape: f32[2,128], index: 2, kind: output, shape index: {}]
  %s3 = sld [smem:[#allocation0]]
  $region22: #{tpu_custom_call.1} parent=0
    _
  %s5 = ssub.s32 1, %s3
  %s6 = scalar_select 0, %s5, %s3
  $region1: #{tpu_custom_call.1} parent=0
    #allocation2 [shape = 'u8[1024]{0}', space=vmem, size = 0x400, scoped, tag = 'output window, operand 0, single buffered']
    #allocation3 [shape = 's32[1]{0}', space=sflag, size = 0x4, scoped, tag = 'scoped memory for tpu_custom_call.1']
    %7 = vsyncpa [#allocation3], 0
    // Predicated region
    $region2: #{tpu_custom_call.1} parent=1 // pred_check
      _
    $region3: #{tpu_custom_call.1} parent=1 // pred_check_branch
      %9 = sbr.rel (0) target = $region5
    $region4: #{tpu_custom_call.1} parent=1 // pred_region
      _
    $region5: #{tpu_custom_call.1} parent=1 // pred_fallthru
      _
    // Predicated region
    $region6: #{tpu_custom_call.1} parent=1 // pred_check
      _
    $region7: #{tpu_custom_call.1} parent=1 // pred_check_branch
      %11 = sbr.rel (0) target = $region9
    $region8: #{tpu_custom_call.1} parent=1 // pred_region
      _
    $region9: #{tpu_custom_call.1} parent=1 // pred_fallthru
      _
    %p13 = scmp.eq.s32.totalorder 0, 0
    // Predicated region
    $region10: #{tpu_custom_call.1} parent=1 // pred_check
      %p14 = pneg %p13
    $region11: #{tpu_custom_call.1} parent=1 // pred_check_branch
      %16 = sbr.rel (%p14) target = $region13
    $region12: #{tpu_custom_call.1} parent=1 // pred_region
      %17 = vst [vmem:[#allocation2] sm:$0x3] 0.0
    $region13: #{tpu_custom_call.1} parent=1 // pred_fallthru
      _
    %v18 = vld [vmem:[%s0] sm:$0xf]
    %v19 = vld [vmem:[%s0 + $0x4] sm:$0xf]
    %v20 = vld [vmem:[%s0 + $0x8] sm:$0xf]
    %v21 = vld [vmem:[%s0 + $0xc] sm:$0xf]
    %v22 = vld [vmem:[%s0 + $0x10] sm:$0xf]
    %v23 = vld [vmem:[%s0 + $0x14] sm:$0xf]
    %v24 = vld [vmem:[%s0 + $0x18] sm:$0xf]
    %v25 = vld [vmem:[%s0 + $0x1c] sm:$0xf]
    %v26 = vld [vmem:[%s0 + $0x20] sm:$0xf]
    %v27 = vld [vmem:[%s0 + $0x24] sm:$0xf]
    %v28 = vld [vmem:[%s0 + $0x28] sm:$0xf]
    %v29 = vld [vmem:[%s0 + $0x2c] sm:$0xf]
    %v30 = vld [vmem:[%s0 + $0x30] sm:$0xf]
    %v31 = vld [vmem:[%s0 + $0x34] sm:$0xf]
    %v32 = vld [vmem:[%s0 + $0x38] sm:$0xf]
    %v33 = vld [vmem:[%s0 + $0x3c] sm:$0xf]
    %v34 = vld [vmem:[%s0 + $0x40] sm:$0xf]
    %v35 = vld [vmem:[%s0 + $0x44] sm:$0xf]
    %v36 = vld [vmem:[%s0 + $0x48] sm:$0xf]
    %v37 = vld [vmem:[%s0 + $0x4c] sm:$0xf]
    %v38 = vld [vmem:[%s0 + $0x50] sm:$0xf]
    %v39 = vld [vmem:[%s0 + $0x54] sm:$0xf]
    %v40 = vld [vmem:[%s0 + $0x58] sm:$0xf]
    %v41 = vld [vmem:[%s0 + $0x5c] sm:$0xf]
    %v42 = vld [vmem:[%s0 + $0x60] sm:$0xf]
    %v43 = vld [vmem:[%s0 + $0x64] sm:$0xf]
    %v44 = vld [vmem:[%s0 + $0x68] sm:$0xf]
    %v45 = vld [vmem:[%s0 + $0x6c] sm:$0xf]
    %v46 = vld [vmem:[%s0 + $0x70] sm:$0xf]
    %v47 = vld [vmem:[%s0 + $0x74] sm:$0xf]
    %v48 = vld [vmem:[%s0 + $0x78] sm:$0xf]
    %v49 = vld [vmem:[%s0 + $0x7c] sm:$0xf]
    %v50 = vld [vmem:[%s0 + $0x80] sm:$0xf]
    %v51 = vld [vmem:[%s0 + $0x84] sm:$0xf]
    %v52 = vld [vmem:[%s0 + $0x88] sm:$0xf]
    %v53 = vld [vmem:[%s0 + $0x8c] sm:$0xf]
    %v54 = vld [vmem:[%s0 + $0x90] sm:$0xf]
    %v55 = vld [vmem:[%s0 + $0x94] sm:$0xf]
    %v56 = vld [vmem:[%s0 + $0x98] sm:$0xf]
    %v57 = vld [vmem:[%s0 + $0x9c] sm:$0xf]
    %v58 = vld [vmem:[%s0 + $0xa0] sm:$0xf]
    %v59 = vld [vmem:[%s0 + $0xa4] sm:$0xf]
    %v60 = vld [vmem:[%s0 + $0xa8] sm:$0xf]
    %v61 = vld [vmem:[%s0 + $0xac] sm:$0xf]
    %v62 = vld [vmem:[%s0 + $0xb0] sm:$0xf]
    %v63 = vld [vmem:[%s0 + $0xb4] sm:$0xf]
    %v64 = vld [vmem:[%s0 + $0xb8] sm:$0xf]
    %v65 = vld [vmem:[%s0 + $0xbc] sm:$0xf]
    %v66 = vld [vmem:[%s0 + $0xc0] sm:$0xf]
    %v67 = vld [vmem:[%s0 + $0xc4] sm:$0xf]
    %v68 = vld [vmem:[%s0 + $0xc8] sm:$0xf]
    %v69 = vld [vmem:[%s0 + $0xcc] sm:$0xf]
    %v70 = vld [vmem:[%s0 + $0xd0] sm:$0xf]
    %v71 = vld [vmem:[%s0 + $0xd4] sm:$0xf]
    %v72 = vld [vmem:[%s0 + $0xd8] sm:$0xf]
    %v73 = vld [vmem:[%s0 + $0xdc] sm:$0xf]
    %v74 = vld [vmem:[%s0 + $0xe0] sm:$0xf]
    %v75 = vld [vmem:[%s0 + $0xe4] sm:$0xf]
    %v76 = vld [vmem:[%s0 + $0xe8] sm:$0xf]
    %v77 = vld [vmem:[%s0 + $0xec] sm:$0xf]
    %v78 = vld [vmem:[%s0 + $0xf0] sm:$0xf]
    %v79 = vld [vmem:[%s0 + $0xf4] sm:$0xf]
    %v80 = vld [vmem:[%s0 + $0xf8] sm:$0xf]
    %v81 = vld [vmem:[%s0 + $0xfc] sm:$0xf]
    %v82 = vld [vmem:[%s1] sm:$0xf]
    %v83 = vld [vmem:[%s1 + $0x4] sm:$0xf]
    %v84 = vld [vmem:[%s1 + $0x8] sm:$0xf]
    %v85 = vld [vmem:[%s1 + $0xc] sm:$0xf]
    %v86 = vld [vmem:[%s1 + $0x10] sm:$0x3]
    %v151 = vunpack.c.l.b16 %v18
    %v152 = vunpack.c.l.b16 %v19
    %v153 = vunpack.c.l.b16 %v20
    %v154 = vunpack.c.l.b16 %v21
    %v155 = vunpack.c.l.b16 %v22
    %v156 = vunpack.c.l.b16 %v23
    %v157 = vunpack.c.l.b16 %v24
    %v158 = vunpack.c.l.b16 %v25
    %v159 = vunpack.c.l.b16 %v26
    %v160 = vunpack.c.l.b16 %v27
    %v161 = vunpack.c.l.b16 %v28
    %v162 = vunpack.c.l.b16 %v29
    %v163 = vunpack.c.l.b16 %v30
    %v164 = vunpack.c.l.b16 %v31
    %v165 = vunpack.c.l.b16 %v32
    %v166 = vunpack.c.l.b16 %v33
    %v167 = vunpack.c.l.b16 %v34
    %v168 = vunpack.c.l.b16 %v35
    %v169 = vunpack.c.l.b16 %v36
    %v170 = vunpack.c.l.b16 %v37
    %v171 = vunpack.c.l.b16 %v38
    %v172 = vunpack.c.l.b16 %v39
    %v173 = vunpack.c.l.b16 %v40
    %v174 = vunpack.c.l.b16 %v41
    %v175 = vunpack.c.l.b16 %v42
    %v176 = vunpack.c.l.b16 %v43
    %v177 = vunpack.c.l.b16 %v44
    %v178 = vunpack.c.l.b16 %v45
    %v179 = vunpack.c.l.b16 %v46
    %v180 = vunpack.c.l.b16 %v47
    %v181 = vunpack.c.l.b16 %v48
    %v182 = vunpack.c.l.b16 %v49
    %v183 = vunpack.c.l.b16 %v50
    %v184 = vunpack.c.l.b16 %v51
    %v185 = vunpack.c.l.b16 %v52
    %v186 = vunpack.c.l.b16 %v53
    %v187 = vunpack.c.l.b16 %v54
    %v188 = vunpack.c.l.b16 %v55
    %v189 = vunpack.c.l.b16 %v56
    %v190 = vunpack.c.l.b16 %v57
    %v191 = vunpack.c.l.b16 %v58
    %v192 = vunpack.c.l.b16 %v59
    %v193 = vunpack.c.l.b16 %v60
    %v194 = vunpack.c.l.b16 %v61
    %v195 = vunpack.c.l.b16 %v62
    %v196 = vunpack.c.l.b16 %v63
    %v197 = vunpack.c.l.b16 %v64
    %v198 = vunpack.c.l.b16 %v65
    %v199 = vunpack.c.l.b16 %v66
    %v200 = vunpack.c.l.b16 %v67
    %v201 = vunpack.c.l.b16 %v68
    %v202 = vunpack.c.l.b16 %v69
    %v203 = vunpack.c.l.b16 %v70
    %v204 = vunpack.c.l.b16 %v71
    %v205 = vunpack.c.l.b16 %v72
    %v206 = vunpack.c.l.b16 %v73
    %v207 = vunpack.c.l.b16 %v74
    %v208 = vunpack.c.l.b16 %v75
    %v209 = vunpack.c.l.b16 %v76
    %v210 = vunpack.c.l.b16 %v77
    %v211 = vunpack.c.l.b16 %v78
    %v212 = vunpack.c.l.b16 %v79
    %v213 = vunpack.c.l.b16 %v80
    %v214 = vunpack.c.l.b16 %v81
    %v215 = vpack.c.b16 %v152, %v151
    %v216 = vpack.c.b16 %v154, %v153
    %v217 = vpack.c.b16 %v156, %v155
    %v218 = vpack.c.b16 %v158, %v157
    %v219 = vpack.c.b16 %v160, %v159
    %v220 = vpack.c.b16 %v162, %v161
    %v221 = vpack.c.b16 %v164, %v163
    %v222 = vpack.c.b16 %v166, %v165
    %v223 = vpack.c.b16 %v168, %v167
    %v224 = vpack.c.b16 %v170, %v169
    %v225 = vpack.c.b16 %v172, %v171
    %v226 = vpack.c.b16 %v174, %v173
    %v227 = vpack.c.b16 %v176, %v175
    %v228 = vpack.c.b16 %v178, %v177
    %v229 = vpack.c.b16 %v180, %v179
    %v230 = vpack.c.b16 %v182, %v181
    %v231 = vpack.c.b16 %v184, %v183
    %v232 = vpack.c.b16 %v186, %v185
    %v233 = vpack.c.b16 %v188, %v187
    %v234 = vpack.c.b16 %v190, %v189
    %v235 = vpack.c.b16 %v192, %v191
    %v236 = vpack.c.b16 %v194, %v193
    %v237 = vpack.c.b16 %v196, %v195
    %v238 = vpack.c.b16 %v198, %v197
    %v239 = vpack.c.b16 %v200, %v199
    %v240 = vpack.c.b16 %v202, %v201
    %v241 = vpack.c.b16 %v204, %v203
    %v242 = vpack.c.b16 %v206, %v205
    %v243 = vpack.c.b16 %v208, %v207
    %v244 = vpack.c.b16 %v210, %v209
    %v245 = vpack.c.b16 %v212, %v211
    %v246 = vpack.c.b16 %v214, %v213
    %v252 = vunpack.c.l.b16 %v82
    %v253 = vunpack.c.l.b16 %v83
    %v254 = vunpack.c.l.b16 %v84
    %v255 = vunpack.c.l.b16 %v85
    %v256 = vunpack.c.l.b16 %v86
    %v257 = vpack.c.b16 %v253, %v252
    %v258 = vpack.c.b16 %v255, %v254
    %v259 = vpack.c.b16 %v256, %v256
    %vm262 = vcmask 293888
    %v264 = vsel %vm262, %v215, 0
    %v267 = vsel %vm262, %v216, 0
    %v270 = vsel %vm262, %v217, 0
    %v273 = vsel %vm262, %v218, 0
    %v276 = vsel %vm262, %v219, 0
    %v279 = vsel %vm262, %v220, 0
    %v282 = vsel %vm262, %v221, 0
    %v285 = vsel %vm262, %v222, 0
    %v288 = vsel %vm262, %v223, 0
    %v291 = vsel %vm262, %v224, 0
    %v294 = vsel %vm262, %v225, 0
    %v297 = vsel %vm262, %v226, 0
    %v300 = vsel %vm262, %v227, 0
    %v303 = vsel %vm262, %v228, 0
    %v306 = vsel %vm262, %v229, 0
    %v309 = vsel %vm262, %v230, 0
    %v312 = vsel %vm262, %v231, 0
    %v315 = vsel %vm262, %v232, 0
    %v318 = vsel %vm262, %v233, 0
    %v321 = vsel %vm262, %v234, 0
    %v324 = vsel %vm262, %v235, 0
    %v327 = vsel %vm262, %v236, 0
    %v330 = vsel %vm262, %v237, 0
    %v333 = vsel %vm262, %v238, 0
    %v336 = vsel %vm262, %v239, 0
    %v339 = vsel %vm262, %v240, 0
    %v342 = vsel %vm262, %v241, 0
    %v345 = vsel %vm262, %v242, 0
    %v348 = vsel %vm262, %v243, 0
    %v351 = vsel %vm262, %v244, 0
    %v354 = vsel %vm262, %v245, 0
    %v357 = vsel %vm262, %v246, 0
    %vm359 = vcmask 1041408
    %v361 = vsel %vm359, %v259, 0
    %363 = vmatpush.bf16.msra.mxu0 0
    %364 = vmatpush.bf16.msra.mxu0 0
    %365 = vmatpush.bf16.msra.mxu0 0
    %366 = vmatpush.bf16.msra.mxu0 0
    %367 = vmatpush.bf16.msra.mxu0 0
    %368 = vmatpush.bf16.msra.mxu0 %v361
    %369 = vmatpush.bf16.msra.mxu0 %v258
    %370 = vmatpush.bf16.msra.mxu0 %v257
    %371 = vmatmul.bf16.gmra.mxu0 %v264
    %v372 = vpop.f32.mrf.mxu0
    %v373 = vadd.f32 0.0, %v372
    %v374 = vpop.f32.mrf.mxu0
    %v375 = vadd.f32 0.0, %v374
    %376 = vmatmul.bf16.gmra.mxu0 %v267
    %v377 = vpop.f32.mrf.mxu0
    %v378 = vadd.f32 0.0, %v377
    %v379 = vpop.f32.mrf.mxu0
    %v380 = vadd.f32 0.0, %v379
    %381 = vmatmul.bf16.gmra.mxu0 %v270
    %v382 = vpop.f32.mrf.mxu0
    %v383 = vadd.f32 0.0, %v382
    %v384 = vpop.f32.mrf.mxu0
    %v385 = vadd.f32 0.0, %v384
    %386 = vmatmul.bf16.gmra.mxu0 %v273
    %v387 = vpop.f32.mrf.mxu0
    %v388 = vadd.f32 0.0, %v387
    %v389 = vpop.f32.mrf.mxu0
    %v390 = vadd.f32 0.0, %v389
    %391 = vmatmul.bf16.gmra.mxu0 %v276
    %v392 = vpop.f32.mrf.mxu0
    %v393 = vadd.f32 0.0, %v392
    %v394 = vpop.f32.mrf.mxu0
    %v395 = vadd.f32 0.0, %v394
    %396 = vmatmul.bf16.gmra.mxu0 %v279
    %v397 = vpop.f32.mrf.mxu0
    %v398 = vadd.f32 0.0, %v397
    %v399 = vpop.f32.mrf.mxu0
    %v400 = vadd.f32 0.0, %v399
    %401 = vmatmul.bf16.gmra.mxu0 %v282
    %v402 = vpop.f32.mrf.mxu0
    %v403 = vadd.f32 0.0, %v402
    %v404 = vpop.f32.mrf.mxu0
    %v405 = vadd.f32 0.0, %v404
    %406 = vmatmul.bf16.gmra.mxu0 %v285
    %v407 = vpop.f32.mrf.mxu0
    %v408 = vadd.f32 0.0, %v407
    %v409 = vpop.f32.mrf.mxu0
    %v410 = vadd.f32 0.0, %v409
    %411 = vmatmul.bf16.gmra.mxu0 %v288
    %v412 = vpop.f32.mrf.mxu0
    %v413 = vadd.f32 0.0, %v412
    %v414 = vpop.f32.mrf.mxu0
    %v415 = vadd.f32 0.0, %v414
    %416 = vmatmul.bf16.gmra.mxu0 %v291
    %v417 = vpop.f32.mrf.mxu0
    %v418 = vadd.f32 0.0, %v417
    %v419 = vpop.f32.mrf.mxu0
    %v420 = vadd.f32 0.0, %v419
    %421 = vmatmul.bf16.gmra.mxu0 %v294
    %v422 = vpop.f32.mrf.mxu0
    %v423 = vadd.f32 0.0, %v422
    %v424 = vpop.f32.mrf.mxu0
    %v425 = vadd.f32 0.0, %v424
    %426 = vmatmul.bf16.gmra.mxu0 %v297
    %v427 = vpop.f32.mrf.mxu0
    %v428 = vadd.f32 0.0, %v427
    %v429 = vpop.f32.mrf.mxu0
    %v430 = vadd.f32 0.0, %v429
    %431 = vmatmul.bf16.gmra.mxu0 %v300
    %v432 = vpop.f32.mrf.mxu0
    %v433 = vadd.f32 0.0, %v432
    %v434 = vpop.f32.mrf.mxu0
    %v435 = vadd.f32 0.0, %v434
    %436 = vmatmul.bf16.gmra.mxu0 %v303
    %v437 = vpop.f32.mrf.mxu0
    %v438 = vadd.f32 0.0, %v437
    %v439 = vpop.f32.mrf.mxu0
    %v440 = vadd.f32 0.0, %v439
    %441 = vmatmul.bf16.gmra.mxu0 %v306
    %v442 = vpop.f32.mrf.mxu0
    %v443 = vadd.f32 0.0, %v442
    %v444 = vpop.f32.mrf.mxu0
    %v445 = vadd.f32 0.0, %v444
    %446 = vmatmul.bf16.gmra.mxu0 %v309
    %v447 = vpop.f32.mrf.mxu0
    %v448 = vadd.f32 0.0, %v447
    %v449 = vpop.f32.mrf.mxu0
    %v450 = vadd.f32 0.0, %v449
    %451 = vmatmul.bf16.gmra.mxu0 %v312
    %v452 = vpop.f32.mrf.mxu0
    %v453 = vadd.f32 0.0, %v452
    %v454 = vpop.f32.mrf.mxu0
    %v455 = vadd.f32 0.0, %v454
    %456 = vmatmul.bf16.gmra.mxu0 %v315
    %v457 = vpop.f32.mrf.mxu0
    %v458 = vadd.f32 0.0, %v457
    %v459 = vpop.f32.mrf.mxu0
    %v460 = vadd.f32 0.0, %v459
    %461 = vmatmul.bf16.gmra.mxu0 %v318
    %v462 = vpop.f32.mrf.mxu0
    %v463 = vadd.f32 0.0, %v462
    %v464 = vpop.f32.mrf.mxu0
    %v465 = vadd.f32 0.0, %v464
    %466 = vmatmul.bf16.gmra.mxu0 %v321
    %v467 = vpop.f32.mrf.mxu0
    %v468 = vadd.f32 0.0, %v467
    %v469 = vpop.f32.mrf.mxu0
    %v470 = vadd.f32 0.0, %v469
    %471 = vmatmul.bf16.gmra.mxu0 %v324
    %v472 = vpop.f32.mrf.mxu0
    %v473 = vadd.f32 0.0, %v472
    %v474 = vpop.f32.mrf.mxu0
    %v475 = vadd.f32 0.0, %v474
    %476 = vmatmul.bf16.gmra.mxu0 %v327
    %v477 = vpop.f32.mrf.mxu0
    %v478 = vadd.f32 0.0, %v477
    %v479 = vpop.f32.mrf.mxu0
    %v480 = vadd.f32 0.0, %v479
    %481 = vmatmul.bf16.gmra.mxu0 %v330
    %v482 = vpop.f32.mrf.mxu0
    %v483 = vadd.f32 0.0, %v482
    %v484 = vpop.f32.mrf.mxu0
    %v485 = vadd.f32 0.0, %v484
    %486 = vmatmul.bf16.gmra.mxu0 %v333
    %v487 = vpop.f32.mrf.mxu0
    %v488 = vadd.f32 0.0, %v487
    %v489 = vpop.f32.mrf.mxu0
    %v490 = vadd.f32 0.0, %v489
    %491 = vmatmul.bf16.gmra.mxu0 %v336
    %v492 = vpop.f32.mrf.mxu0
    %v493 = vadd.f32 0.0, %v492
    %v494 = vpop.f32.mrf.mxu0
    %v495 = vadd.f32 0.0, %v494
    %496 = vmatmul.bf16.gmra.mxu0 %v339
    %v497 = vpop.f32.mrf.mxu0
    %v498 = vadd.f32 0.0, %v497
    %v499 = vpop.f32.mrf.mxu0
    %v500 = vadd.f32 0.0, %v499
    %501 = vmatmul.bf16.gmra.mxu0 %v342
    %v502 = vpop.f32.mrf.mxu0
    %v503 = vadd.f32 0.0, %v502
    %v504 = vpop.f32.mrf.mxu0
    %v505 = vadd.f32 0.0, %v504
    %506 = vmatmul.bf16.gmra.mxu0 %v345
    %v507 = vpop.f32.mrf.mxu0
    %v508 = vadd.f32 0.0, %v507
    %v509 = vpop.f32.mrf.mxu0
    %v510 = vadd.f32 0.0, %v509
    %511 = vmatmul.bf16.gmra.mxu0 %v348
    %v512 = vpop.f32.mrf.mxu0
    %v513 = vadd.f32 0.0, %v512
    %v514 = vpop.f32.mrf.mxu0
    %v515 = vadd.f32 0.0, %v514
    %516 = vmatmul.bf16.gmra.mxu0 %v351
    %v517 = vpop.f32.mrf.mxu0
    %v518 = vadd.f32 0.0, %v517
    %v519 = vpop.f32.mrf.mxu0
    %v520 = vadd.f32 0.0, %v519
    %521 = vmatmul.bf16.gmra.mxu0 %v354
    %v522 = vpop.f32.mrf.mxu0
    %v523 = vadd.f32 0.0, %v522
    %v524 = vpop.f32.mrf.mxu0
    %v525 = vadd.f32 0.0, %v524
    %526 = vmatmul.bf16.gmra.mxu0 %v357
    %v527 = vpop.f32.mrf.mxu0
    %v528 = vadd.f32 0.0, %v527
    %v529 = vpop.f32.mrf.mxu0
    %v530 = vadd.f32 0.0, %v529
    %531 = vdwg.mxu0
    %v532 = vld [vmem:[#allocation2] sm:$0x1]
    %v533 = vadd.f32 %v373, %v375
    %v534 = vadd.f32 %v533, %v378
    %v535 = vadd.f32 %v534, %v380
    %v536 = vadd.f32 %v535, %v383
    %v537 = vadd.f32 %v536, %v385
    %v538 = vadd.f32 %v537, %v388
    %v539 = vadd.f32 %v538, %v390
    %v540 = vadd.f32 %v539, %v393
    %v541 = vadd.f32 %v540, %v395
    %v542 = vadd.f32 %v541, %v398
    %v543 = vadd.f32 %v542, %v400
    %v544 = vadd.f32 %v543, %v403
    %v545 = vadd.f32 %v544, %v405
    %v546 = vadd.f32 %v545, %v408
    %v547 = vadd.f32 %v546, %v410
    %v548 = vadd.f32 %v547, %v413
    %v549 = vadd.f32 %v548, %v415
    %v550 = vadd.f32 %v549, %v418
    %v551 = vadd.f32 %v550, %v420
    %v552 = vadd.f32 %v551, %v423
    %v553 = vadd.f32 %v552, %v425
    %v554 = vadd.f32 %v553, %v428
    %v555 = vadd.f32 %v554, %v430
    %v556 = vadd.f32 %v555, %v433
    %v557 = vadd.f32 %v556, %v435
    %v558 = vadd.f32 %v557, %v438
    %v559 = vadd.f32 %v558, %v440
    %v560 = vadd.f32 %v559, %v443
    %v561 = vadd.f32 %v560, %v445
    %v562 = vadd.f32 %v561, %v448
    %v563 = vadd.f32 %v562, %v450
    %v564 = vadd.f32 %v563, %v453
    %v565 = vadd.f32 %v564, %v455
    %v566 = vadd.f32 %v565, %v458
    %v567 = vadd.f32 %v566, %v460
    %v568 = vadd.f32 %v567, %v463
    %v569 = vadd.f32 %v568, %v465
    %v570 = vadd.f32 %v569, %v468
    %v571 = vadd.f32 %v570, %v470
    %v572 = vadd.f32 %v571, %v473
    %v573 = vadd.f32 %v572, %v475
    %v574 = vadd.f32 %v573, %v478
    %v575 = vadd.f32 %v574, %v480
    %v576 = vadd.f32 %v575, %v483
    %v577 = vadd.f32 %v576, %v485
    %v578 = vadd.f32 %v577, %v488
    %v579 = vadd.f32 %v578, %v490
    %v580 = vadd.f32 %v579, %v493
    %v581 = vadd.f32 %v580, %v495
    %v582 = vadd.f32 %v581, %v498
    %v583 = vadd.f32 %v582, %v500
    %v584 = vadd.f32 %v583, %v503
    %v585 = vadd.f32 %v584, %v505
    %v586 = vadd.f32 %v585, %v508
    %v587 = vadd.f32 %v586, %v510
    %v588 = vadd.f32 %v587, %v513
    %v589 = vadd.f32 %v588, %v515
    %v590 = vadd.f32 %v589, %v518
    %v591 = vadd.f32 %v590, %v520
    %v592 = vadd.f32 %v591, %v523
    %v593 = vadd.f32 %v592, %v525
    %v594 = vadd.f32 %v593, %v528
    %v595 = vadd.f32 %v594, %v530
    %v596 = vrot.slane %v595, 4
    %v597 = vadd.f32 %v595, %v596
    %v598 = vrot.slane %v597, 2
    %v599 = vadd.f32 %v597, %v598
    %v600 = vrot.slane %v599, 1
    %v601 = vadd.f32 %v599, %v600
    %v602 = vadd.f32 %v532, %v601
    %603 = vst [vmem:[#allocation2] sm:$0x1] %v602
    %v604 = vld [vmem:[#allocation2 + $0x1] sm:$0x1]
    %v605 = vmul.f32 %v373, %v373
    %v606 = vmul.f32 %v375, %v375
    %v607 = vmul.f32 %v378, %v378
    %v608 = vmul.f32 %v380, %v380
    %v609 = vmul.f32 %v383, %v383
    %v610 = vmul.f32 %v385, %v385
    %v611 = vmul.f32 %v388, %v388
    %v612 = vmul.f32 %v390, %v390
    %v613 = vmul.f32 %v393, %v393
    %v614 = vmul.f32 %v395, %v395
    %v615 = vmul.f32 %v398, %v398
    %v616 = vmul.f32 %v400, %v400
    %v617 = vmul.f32 %v403, %v403
    %v618 = vmul.f32 %v405, %v405
    %v619 = vmul.f32 %v408, %v408
    %v620 = vmul.f32 %v410, %v410
    %v621 = vmul.f32 %v413, %v413
    %v622 = vmul.f32 %v415, %v415
    %v623 = vmul.f32 %v418, %v418
    %v624 = vmul.f32 %v420, %v420
    %v625 = vmul.f32 %v423, %v423
    %v626 = vmul.f32 %v425, %v425
    %v627 = vmul.f32 %v428, %v428
    %v628 = vmul.f32 %v430, %v430
    %v629 = vmul.f32 %v433, %v433
    %v630 = vmul.f32 %v435, %v435
    %v631 = vmul.f32 %v438, %v438
    %v632 = vmul.f32 %v440, %v440
    %v633 = vmul.f32 %v443, %v443
    %v634 = vmul.f32 %v445, %v445
    %v635 = vmul.f32 %v448, %v448
    %v636 = vmul.f32 %v450, %v450
    %v637 = vmul.f32 %v453, %v453
    %v638 = vmul.f32 %v455, %v455
    %v639 = vmul.f32 %v458, %v458
    %v640 = vmul.f32 %v460, %v460
    %v641 = vmul.f32 %v463, %v463
    %v642 = vmul.f32 %v465, %v465
    %v643 = vmul.f32 %v468, %v468
    %v644 = vmul.f32 %v470, %v470
    %v645 = vmul.f32 %v473, %v473
    %v646 = vmul.f32 %v475, %v475
    %v647 = vmul.f32 %v478, %v478
    %v648 = vmul.f32 %v480, %v480
    %v649 = vmul.f32 %v483, %v483
    %v650 = vmul.f32 %v485, %v485
    %v651 = vmul.f32 %v488, %v488
    %v652 = vmul.f32 %v490, %v490
    %v653 = vmul.f32 %v493, %v493
    %v654 = vmul.f32 %v495, %v495
    %v655 = vmul.f32 %v498, %v498
    %v656 = vmul.f32 %v500, %v500
    %v657 = vmul.f32 %v503, %v503
    %v658 = vmul.f32 %v505, %v505
    %v659 = vmul.f32 %v508, %v508
    %v660 = vmul.f32 %v510, %v510
    %v661 = vmul.f32 %v513, %v513
    %v662 = vmul.f32 %v515, %v515
    %v663 = vmul.f32 %v518, %v518
    %v664 = vmul.f32 %v520, %v520
    %v665 = vmul.f32 %v523, %v523
    %v666 = vmul.f32 %v525, %v525
    %v667 = vmul.f32 %v528, %v528
    %v668 = vmul.f32 %v530, %v530
    %v669 = vadd.f32 %v605, %v606
    %v670 = vadd.f32 %v669, %v607
    %v671 = vadd.f32 %v670, %v608
    %v672 = vadd.f32 %v671, %v609
    %v673 = vadd.f32 %v672, %v610
    %v674 = vadd.f32 %v673, %v611
    %v675 = vadd.f32 %v674, %v612
    %v676 = vadd.f32 %v675, %v613
    %v677 = vadd.f32 %v676, %v614
    %v678 = vadd.f32 %v677, %v615
    %v679 = vadd.f32 %v678, %v616
    %v680 = vadd.f32 %v679, %v617
    %v681 = vadd.f32 %v680, %v618
    %v682 = vadd.f32 %v681, %v619
    %v683 = vadd.f32 %v682, %v620
    %v684 = vadd.f32 %v683, %v621
    %v685 = vadd.f32 %v684, %v622
    %v686 = vadd.f32 %v685, %v623
    %v687 = vadd.f32 %v686, %v624
    %v688 = vadd.f32 %v687, %v625
    %v689 = vadd.f32 %v688, %v626
    %v690 = vadd.f32 %v689, %v627
    %v691 = vadd.f32 %v690, %v628
    %v692 = vadd.f32 %v691, %v629
    %v693 = vadd.f32 %v692, %v630
    %v694 = vadd.f32 %v693, %v631
    %v695 = vadd.f32 %v694, %v632
    %v696 = vadd.f32 %v695, %v633
    %v697 = vadd.f32 %v696, %v634
    %v698 = vadd.f32 %v697, %v635
    %v699 = vadd.f32 %v698, %v636
    %v700 = vadd.f32 %v699, %v637
    %v701 = vadd.f32 %v700, %v638
    %v702 = vadd.f32 %v701, %v639
    %v703 = vadd.f32 %v702, %v640
    %v704 = vadd.f32 %v703, %v641
    %v705 = vadd.f32 %v704, %v642
    %v706 = vadd.f32 %v705, %v643
    %v707 = vadd.f32 %v706, %v644
    %v708 = vadd.f32 %v707, %v645
    %v709 = vadd.f32 %v708, %v646
    %v710 = vadd.f32 %v709, %v647
    %v711 = vadd.f32 %v710, %v648
    %v712 = vadd.f32 %v711, %v649
    %v713 = vadd.f32 %v712, %v650
    %v714 = vadd.f32 %v713, %v651
    %v715 = vadd.f32 %v714, %v652
    %v716 = vadd.f32 %v715, %v653
    %v717 = vadd.f32 %v716, %v654
    %v718 = vadd.f32 %v717, %v655
    %v719 = vadd.f32 %v718, %v656
    %v720 = vadd.f32 %v719, %v657
    %v721 = vadd.f32 %v720, %v658
    %v722 = vadd.f32 %v721, %v659
    %v723 = vadd.f32 %v722, %v660
    %v724 = vadd.f32 %v723, %v661
    %v725 = vadd.f32 %v724, %v662
    %v726 = vadd.f32 %v725, %v663
    %v727 = vadd.f32 %v726, %v664
    %v728 = vadd.f32 %v727, %v665
    %v729 = vadd.f32 %v728, %v666
    %v730 = vadd.f32 %v729, %v667
    %v731 = vadd.f32 %v730, %v668
    %v732 = vrot.slane %v731, 4
    %v733 = vadd.f32 %v731, %v732
    %v734 = vrot.slane %v733, 2
    %v735 = vadd.f32 %v733, %v734
    %v736 = vrot.slane %v735, 1
    %v737 = vadd.f32 %v735, %v736
    %v738 = vadd.f32 %v604, %v737
    %739 = vst [vmem:[#allocation2 + $0x1] sm:$0x1] %v738
    // Predicated region
    $region14: #{tpu_custom_call.1} parent=1 // pred_check
      _
    $region15: #{tpu_custom_call.1} parent=1 // pred_check_branch
      %741 = sbr.rel (0) target = $region17
    $region16: #{tpu_custom_call.1} parent=1 // pred_region
      %743 = vsyncadd [#allocation3], 0
      %s745 = sshll.u32 [#allocation2], 4
      %s746 = int_to_ptr.vmem [resolvable:$true] %s745
      %s747 = sshll.u32 %s2, 4
      %s748 = int_to_ptr.hbm [resolvable:$true] %s747
      %750 = dma.vmem_to_hbm [thread:$0]  %s746, 32, %s748, [#allocation3]
    $region17: #{tpu_custom_call.1} parent=1 // pred_fallthru
      _
    // Predicated region
    $region18: #{tpu_custom_call.1} parent=1 // pred_check
      _
    $region19: #{tpu_custom_call.1} parent=1 // pred_check_branch
      %752 = sbr.rel (0) target = $region21
    $region20: #{tpu_custom_call.1} parent=1 // pred_region
      %754 = dma.done [#allocation3], 32
    $region21: #{tpu_custom_call.1} parent=1 // pred_fallthru
      _
    %755 = vsyncpa [#allocation3], 1

</llo_original>
